<compile_context>
chip_gen: v7x
topology: tpu7x:2x2x1
jax: 0.10.0
libtpu: 0.0.40
codegen_flags: <defaults>
</compile_context>

<pallas_src>
import functools

import jax
import jax.numpy as jnp
from jax.experimental import pallas as pl
from jax.experimental.pallas import tpu as pltpu


def _int_pow(x, gamma):
    """x ** gamma as a multiply chain when gamma is a non-negative integer.

    Keeps the EUP free for the (TILE_N, C) exp and avoids pow -> exp(log)
    NaNs at x == 0 (e.g. p_t == 1).  Falls back to ** otherwise.
    """
    g = None
    if isinstance(gamma, int):
        g = gamma
    elif isinstance(gamma, float) and float(gamma).is_integer():
        g = int(gamma)
    if g is None or g < 0:
        return x ** gamma
    if g == 0:
        return jnp.ones_like(x)
    result = None
    base = x
    while g:
        if g & 1:
            result = base if result is None else result * base
        g >>= 1
        if g:
            base = base * base
    return result


def _asl_kernel(x_ref, t_ref, loss_ref, *, gamma_pos, gamma_neg):
    # x_ref:    (TILE_N, C) logits (any float dtype; upconverted to f32 here).
    # t_ref:    (TILE_N, 1) int32 target class ids.
    # loss_ref: (TILE_N, 1) f32 per-row loss; rows past N in a ragged last
    #           tile are dropped by the pipeline's edge-block writeback.
    x = x_ref[...].astype(jnp.float32)
    t = t_ref[...]
    tn, c = x.shape

    # Row-wise softmax pieces.  Only the un-normalized exp lives at
    # (TILE_N, C); normalization happens on (TILE_N, 1) quantities.
    m = jnp.max(x, axis=1, keepdims=True)
    e = jnp.exp(x - m)                                   # (TILE_N, C)
    denom = jnp.sum(e, axis=1, keepdims=True)            # (TILE_N, 1)
    inv_denom = 1.0 / denom                              # (TILE_N, 1)

    # p_t = softmax(x)[target] without materializing a float one-hot.
    class_ids = jax.lax.broadcasted_iota(jnp.int32, (tn, c), 1)
    is_target = class_ids == t                           # (TILE_N, C) bool
    e_t = jnp.sum(jnp.where(is_target, e, 0.0), axis=1, keepdims=True)
    p_t = e_t * inv_denom                                # (TILE_N, 1)

    # The reference module uses log(1 - probs.sum(dim=1)), which is log(~0)
    # by construction (intentionally ill-conditioned).  Sum the per-element
    # probabilities explicitly so the rounding behaviour mirrors PyTorch
    # instead of collapsing to exactly log(0).
    sum_probs = jnp.sum(e * inv_denom, axis=1, keepdims=True)
    sum_neg = sum_probs - p_t        # == sum(probs * (1 - one_hot), dim=1)

    loss_pos = -_int_pow(1.0 - p_t, gamma_pos) * jnp.log(p_t)
    loss_neg = -_int_pow(sum_neg, gamma_neg) * jnp.log(1.0 - sum_probs)
    loss_ref[...] = (loss_pos + loss_neg).astype(loss_ref.dtype)


def _pick_tile_n(n, c, itemsize):
    # ~4 MiB of logits per tile: double-buffered by the pipeline this stays
    # well under v5e's 16 MiB scoped-VMEM default and v7x's 64 MiB physical
    # VMEM, while keeping tiles large enough that the ~0.35 us per-grid-step
    # overhead is amortized.
    budget_bytes = 4 * 1024 * 1024
    rows = budget_bytes // max(1, c * itemsize)
    rows = min(max(rows, 8), n, 2048)
    return max(8, (rows // 8) * 8)   # multiple of 8 sublanes


def asymmetric_loss(inputs, targets, gamma_pos=1, gamma_neg=4, reduction="mean"):
    """JAX/Pallas equivalent of AsymmetricLoss(gamma_pos, gamma_neg, reduction)."""
    n, c = inputs.shape
    if not jnp.issubdtype(inputs.dtype, jnp.floating):
        inputs = inputs.astype(jnp.float32)
    t2 = targets.astype(jnp.int32).reshape(n, 1)

    tile_n = _pick_tile_n(n, c, inputs.dtype.itemsize)
    grid = (pl.cdiv(n, tile_n),)

    # TODO(synk): a class axis too large for an 8-row tile would need C-axis
    # tiling with a cross-tile softmax carry; C is kept as the full block extent.
    per_row = pl.pallas_call(
        functools.partial(_asl_kernel, gamma_pos=gamma_pos, gamma_neg=gamma_neg),
        grid=grid,
        in_specs=[
            pl.BlockSpec((tile_n, c), lambda i: (i, 0)),   # logits tile
            pl.BlockSpec((tile_n, 1), lambda i: (i, 0)),   # targets tile
        ],
        out_specs=pl.BlockSpec((tile_n, 1), lambda i: (i, 0)),
        out_shape=jax.ShapeDtypeStruct((n, 1), jnp.float32),
        compiler_params=pltpu.CompilerParams(
            # No carried state across the grid -> both v7x TensorCores can
            # split the batch tiles.
            dimension_semantics=("parallel",),
            vmem_limit_bytes=32 * 1024 * 1024,
        ),
    )(inputs, t2)

    per_row = per_row[:, 0]
    if reduction == "mean":
        return jnp.mean(per_row)        # divides by the global N
    if reduction == "sum":
        return jnp.sum(per_row)
    return per_row


if __name__ == "__main__":
    key = jax.random.PRNGKey(0)
    k_x, k_t, k_x2, k_t2 = jax.random.split(key, 4)

    # Shapes consistent with the module: (batch, num_classes) logits + int targets.
    batch, num_classes = 8, 16
    logits = jax.random.normal(k_x, (batch, num_classes), dtype=jnp.float32)
    targets = jax.random.randint(k_t, (batch,), 0, num_classes, dtype=jnp.int32)
    loss = asymmetric_loss(logits, targets, gamma_pos=1, gamma_neg=4)
    jax.block_until_ready(loss)

    # Second call exercises a ragged last batch tile (20 rows, 16-row tiles).
    logits2 = jax.random.normal(k_x2, (20, num_classes), dtype=jnp.float32)
    targets2 = jax.random.randint(k_t2, (20,), 0, num_classes, dtype=jnp.int32)
    loss2 = asymmetric_loss(logits2, targets2, gamma_pos=1, gamma_neg=4)
    jax.block_until_ready(loss2)

    print("KERNEL_OK")
</pallas_src>

<mosaic_0001>
module attributes {stable_mosaic.version = 11 : i64} {
  func.func @_asl_kernel(%arg0: i32, %arg1: memref<8x16xf32, #tpu.memory_space<vmem>>, %arg2: memref<8x1xi32, #tpu.memory_space<vmem>>, %arg3: memref<8x1xf32, #tpu.memory_space<vmem>>) attributes {dimension_semantics = [#tpu.dimension_semantics<parallel>], iteration_bounds = array<i64: 1>, scalar_prefetch = 0 : i64, scratch_operands = 0 : i64, tpu.core_type = #tpu.core_type<tc>, window_params = [{transform_indices = @transform_0, window_bounds = array<i64: 8, 16>}, {transform_indices = @transform_1, window_bounds = array<i64: 8, 1>}, {transform_indices = @transform_2, window_bounds = array<i64: 8, 1>}]} {
    %c0 = arith.constant 0 : index
    %c0_0 = arith.constant 0 : index
    %0 = vector.load %arg1[%c0, %c0_0] : memref<8x16xf32, #tpu.memory_space<vmem>>, vector<8x16xf32>
    %c0_1 = arith.constant 0 : index
    %c0_2 = arith.constant 0 : index
    %1 = vector.load %arg2[%c0_1, %c0_2] : memref<8x1xi32, #tpu.memory_space<vmem>>, vector<8x1xi32>
    %cst = arith.constant dense<0xFF800000> : vector<8xf32>
    %2 = vector.multi_reduction <maximumf>, %0, %cst [1] : vector<8x16xf32> to vector<8xf32>
    %3 = vector.shape_cast %2 : vector<8xf32> to vector<8x1xf32>
    %4 = vector.broadcast %3 : vector<8x1xf32> to vector<8x16xf32>
    %5 = arith.subf %0, %4 : vector<8x16xf32>
    %6 = math.exp %5 : vector<8x16xf32>
    %cst_3 = arith.constant dense<0.000000e+00> : vector<8xf32>
    %7 = vector.multi_reduction <add>, %6, %cst_3 [1] : vector<8x16xf32> to vector<8xf32>
    %8 = vector.shape_cast %7 : vector<8xf32> to vector<8x1xf32>
    %cst_4 = arith.constant 1.000000e+00 : f32
    %9 = vector.broadcast %cst_4 : f32 to vector<8x1xf32>
    %10 = arith.divf %9, %8 : vector<8x1xf32>
    %11 = tpu.iota {dimensions = array<i32: 1>} : vector<8x16xi32>
    %12 = vector.broadcast %1 : vector<8x1xi32> to vector<8x16xi32>
    %13 = arith.cmpi eq, %11, %12 : vector<8x16xi32>
    %cst_5 = arith.constant 0.000000e+00 : f32
    %14 = vector.broadcast %cst_5 : f32 to vector<8x16xf32>
    %15 = arith.select %13, %6, %14 : vector<8x16xi1>, vector<8x16xf32>
    %cst_6 = arith.constant dense<0.000000e+00> : vector<8xf32>
    %16 = vector.multi_reduction <add>, %15, %cst_6 [1] : vector<8x16xf32> to vector<8xf32>
    %17 = vector.shape_cast %16 : vector<8xf32> to vector<8x1xf32>
    %18 = arith.mulf %17, %10 : vector<8x1xf32>
    %19 = vector.broadcast %10 : vector<8x1xf32> to vector<8x16xf32>
    %20 = arith.mulf %6, %19 : vector<8x16xf32>
    %cst_7 = arith.constant dense<0.000000e+00> : vector<8xf32>
    %21 = vector.multi_reduction <add>, %20, %cst_7 [1] : vector<8x16xf32> to vector<8xf32>
    %22 = vector.shape_cast %21 : vector<8xf32> to vector<8x1xf32>
    %23 = arith.subf %22, %18 : vector<8x1xf32>
    %cst_8 = arith.constant 1.000000e+00 : f32
    %24 = vector.broadcast %cst_8 : f32 to vector<8x1xf32>
    %25 = arith.subf %24, %18 : vector<8x1xf32>
    %cst_9 = arith.constant 0.000000e+00 : f32
    %26 = vector.broadcast %cst_9 : f32 to vector<8x1xf32>
    %27 = arith.subf %26, %25 : vector<8x1xf32>
    %28 = math.log %18 : vector<8x1xf32>
    %29 = arith.mulf %27, %28 : vector<8x1xf32>
    %30 = arith.mulf %23, %23 : vector<8x1xf32>
    %31 = arith.mulf %30, %30 : vector<8x1xf32>
    %cst_10 = arith.constant 0.000000e+00 : f32
    %32 = vector.broadcast %cst_10 : f32 to vector<8x1xf32>
    %33 = arith.subf %32, %31 : vector<8x1xf32>
    %cst_11 = arith.constant 1.000000e+00 : f32
    %34 = vector.broadcast %cst_11 : f32 to vector<8x1xf32>
    %35 = arith.subf %34, %22 : vector<8x1xf32>
    %36 = math.log %35 : vector<8x1xf32>
    %37 = arith.mulf %33, %36 : vector<8x1xf32>
    %38 = arith.addf %29, %37 : vector<8x1xf32>
    %c0_12 = arith.constant 0 : index
    %c0_13 = arith.constant 0 : index
    %39 = vector.load %arg3[%c0_12, %c0_13] : memref<8x1xf32, #tpu.memory_space<vmem>>, vector<8x1xf32>
    tpu.vector_store %arg3[%c0_12, %c0_13], %38 {strides = array<i32>} : memref<8x1xf32, #tpu.memory_space<vmem>>, vector<8x1xf32>,
    return
  }
  func.func @transform_0(%arg0: i32) -> (i32, i32) {
    %c0_i32 = arith.constant 0 : i32
    %c0_i32_0 = arith.constant 0 : i32
    return %arg0, %c0_i32 : i32, i32
  }
  func.func @transform_1(%arg0: i32) -> (i32, i32) {
    %c0_i32 = arith.constant 0 : i32
    %c0_i32_0 = arith.constant 0 : i32
    return %arg0, %c0_i32 : i32, i32
  }
  func.func @transform_2(%arg0: i32) -> (i32, i32) {
    %c0_i32 = arith.constant 0 : i32
    %c0_i32_0 = arith.constant 0 : i32
    return %arg0, %c0_i32 : i32, i32
  }
}

</mosaic_0001>

<llo_original>
// kernel: tpu_custom_call.1
$region0: #{tpu_custom_call.1}
  #allocation0 [shape = 'u32[]', space=smem, size = 0x4, offset = 0x4, fixed_abs, tag = 'smem constant byte address 0x4 - core index']
  #allocation1 [shape = 'u32[144,128]{1,0:T(1,128)}', space=vmem, size = 0x12000, scoped, tag = 'internal scratch']
  %s0 = inlined_call_operand.vmem [shape: f32[8,16], index: 0, kind: input, shape index: {}]
  %s1 = inlined_call_operand.vmem [shape: s32[8,1], index: 1, kind: input, shape index: {}]
  %s2 = inlined_call_operand.vmem [shape: f32[8,1], index: 2, kind: output, shape index: {}]
  %s3 = sld [smem:[#allocation0]]
  $region18: #{tpu_custom_call.1} parent=0
    _
  %s5 = ssub.s32 1, %s3
  %s6 = scalar_select 0, %s5, %s3
  // Predicated region
  $region2: #{tpu_custom_call.1} parent=0 // pred_check
    _
  $region3: #{tpu_custom_call.1} parent=0 // pred_check_branch
    %8 = sbr.rel (0) target = $region5
  $region4: #{tpu_custom_call.1} parent=0 // pred_region
    _
  $region5: #{tpu_custom_call.1} parent=0 // pred_fallthru
    _
  // Predicated region
  $region6: #{tpu_custom_call.1} parent=0 // pred_check
    _
  $region7: #{tpu_custom_call.1} parent=0 // pred_check_branch
    %10 = sbr.rel (0) target = $region9
  $region8: #{tpu_custom_call.1} parent=0 // pred_region
    _
  $region9: #{tpu_custom_call.1} parent=0 // pred_fallthru
    _
  %v11 = vld [vmem:[%s0] sm:$0xff]
  %v12 = vld [vmem:[%s1] sm:$0xff]
  %vm13 = vcmask 130048
  %v14 = vsel %vm13, %v11, -inf
  %15 = vmax.xlane.f32.xlu0 %v14
  %v16 = vpop.xlane.xlu0 %15
  %v17 = vsub.f32 %v11, %v16
  %v18 = vmul.f32 %v17, 1.442695
  %v19 = vpow.pop %v18
  %v20 = vsel %vm13, %v19, 0.0
  %21 = vadd.xlane.f32.xlu0 %v20
  %v22 = vpop.xlane.xlu0 %21
  %v23 = vrcp.pop %v22
  %v24 = vmul.f32 1.0, %v23
  %v25 = vlaneseq
  %v26 = vand.u32 %v25, 127
  %27 = vset.pattern.permute.xlu0 0
  %28 = vperm.xlu0 %27, %v12
  %v29 = vpop.permute.xlu0 %28
  %vm30 = vcmp.eq.s32.totalorder %v26, %v29
  %v31 = vsel %vm30, %v19, 0.0
  %v32 = vsel %vm13, %v31, 0.0
  %33 = vadd.xlane.f32.xlu0 %v32
  %v34 = vpop.xlane.xlu0 %33
  %v35 = vmul.f32 %v34, %v24
  %v36 = vmul.f32 %v19, %v24
  %v37 = vsel %vm13, %v36, 0.0
  %38 = vadd.xlane.f32.xlu0 %v37
  %v39 = vpop.xlane.xlu0 %38
  %v40 = vsub.f32 %v39, %v35
  %v41 = vsub.f32 1.0, %v35
  %v42 = vsub.f32 0.0, %v41
  %v43 = vlog2.pop %v35
  %v44 = vmul.f32 %v43, 0.6931472
  %v45 = vmul.f32 %v42, %v44
  %v46 = vmul.f32 %v40, %v40
  %v47 = vmul.f32 %v46, %v46
  %v48 = vsub.f32 0.0, %v47
  %v49 = vsub.f32 1.0, %v39
  %v50 = vlog2.pop %v49
  %v51 = vmul.f32 %v50, 0.6931472
  %v52 = vmul.f32 %v48, %v51
  %v53 = vadd.f32 %v45, %v52
  %vm54 = vcmask 7168
  %55 = vst.msk [vmem:[%s2] sm:$0xff] %vm54, %v53
  // Predicated region
  $region10: #{tpu_custom_call.1} parent=0 // pred_check
    _
  $region11: #{tpu_custom_call.1} parent=0 // pred_check_branch
    %57 = sbr.rel (0) target = $region13
  $region12: #{tpu_custom_call.1} parent=0 // pred_region
    _
  $region13: #{tpu_custom_call.1} parent=0 // pred_fallthru
    _
  // Predicated region
  $region14: #{tpu_custom_call.1} parent=0 // pred_check
    _
  $region15: #{tpu_custom_call.1} parent=0 // pred_check_branch
    %59 = sbr.rel (0) target = $region17
  $region16: #{tpu_custom_call.1} parent=0 // pred_region
    _
  $region17: #{tpu_custom_call.1} parent=0 // pred_fallthru
    _

</llo_original>
